<compile_context>
chip_gen: v7x
topology: tpu7x:2x2x1
jax: 0.10.0
libtpu: 0.0.40
codegen_flags: <defaults>
</compile_context>

<pallas_src>
import functools

import jax
import jax.numpy as jnp
from jax.experimental import pallas as pl
from jax.experimental.pallas import tpu as pltpu


def _round_up(a: int, b: int) -> int:
    return (a + b - 1) // b * b


def _vmem_capacity_bytes() -> int:
    """Physical VMEM per TensorCore; conservative fallback if not queryable."""
    try:
        return int(pltpu.get_tpu_info().vmem_capacity_bytes)
    except Exception:
        return 64 << 20  # v7x per-TC size: safe lower bound


def _pick_ti(I: int, block_i: int) -> int:
    """Largest ti <= block_i dividing I, preferring 256-aligned, min 128-aligned.

    256 keeps the down-proj K dim MXU-native on v6e/v7x and the gate/up static
    slices on 128-lane vreg boundaries; 128 is the floor (v5e).  Falls back to
    the full intermediate dim for tiny models (block == full array dim).
    """
    for align in (256, 128):
        cand = (min(block_i, I) // align) * align
        while cand >= align:
            if I % cand == 0:
                return cand
            cand -= align
    return I


def prepare_mlp_weights(wg, wu, wd, *, block_i: int | None = None,
                        weight_dtype=None):
    """One-time weight preprocessing (call at weight-load time, NOT per forward).

    wg, wu: [I, H]; wd: [H, I]  (PyTorch nn.Linear layout).
    Returns (wgu, wd_t, ti):
      wgu : [H, 2*I], chunk-interleaved so columns [j*2ti, (j+1)*2ti) hold
            [gate chunk j | up chunk j] -- one (H, 2*ti) block per grid step.
      wd_t: [I, H]
    weight_dtype: optionally cast the prepared weights (e.g. jnp.bfloat16 for
      ~2x less weight DMA and bf16-peak MXU; accumulation stays f32).
    """
    I, H = wg.shape
    assert wu.shape == (I, H) and wd.shape == (H, I)
    if block_i is None:
        # Larger I-chunks on 128-MiB VMEM parts (v5e/v6e), smaller on v7x.
        block_i = 512 if _vmem_capacity_bytes() >= (100 << 20) else 256
    ti = _pick_ti(I, block_i)
    nI = I // ti
    wg_t = wg.T  # (H, I)
    wu_t = wu.T  # (H, I)
    wgu = jnp.concatenate(
        [wg_t.reshape(H, nI, ti), wu_t.reshape(H, nI, ti)], axis=2
    ).reshape(H, 2 * I)
    wd_t = wd.T  # (I, H)
    if weight_dtype is not None:
        wgu = wgu.astype(weight_dtype)
        wd_t = wd_t.astype(weight_dtype)
    return wgu, wd_t, ti


def _mlp_kernel(x_ref, wgu_ref, wd_ref, o_ref, acc_ref, *, ti, approx_silu):
    # x_ref: (tm, H)   wgu_ref: (H, 2*ti)   wd_ref: (ti, H)
    # o_ref: (tm, H)   acc_ref: (tm, H) f32 scratch
    j = pl.program_id(1)

    @pl.when(j == 0)
    def _():
        acc_ref[...] = jnp.zeros_like(acc_ref)

    # Run the MXU in the (possibly narrower) weight dtype; accumulate in f32.
    x = x_ref[...].astype(wgu_ref.dtype)
    # Fused gate|up projection: one MXU pass with a 2x wider N.
    gu = jnp.dot(x, wgu_ref[...], preferred_element_type=jnp.float32)
    gate = gu[:, :ti]          # ti is 128/256-aligned -> lane-aligned slices
    up = gu[:, ti:]
    # SiLU: exp + reciprocal stay on the EUP slot (approx path only when the
    # output is bf16, where the approximation error is below output precision).
    sig = pl.reciprocal(1.0 + jnp.exp(-gate), approx=approx_silu)
    inter = (gate * sig) * up
    # Down-projection partial sum for this I-chunk.
    acc_ref[...] += jnp.dot(inter.astype(wd_ref.dtype), wd_ref[...],
                            preferred_element_type=jnp.float32)

    @pl.when(j == pl.num_programs(1) - 1)
    def _():
        o_ref[...] = acc_ref[...].astype(o_ref.dtype)


def mlp_forward(x, wgu, wd_t, ti, *, block_m: int | None = None,
                weight_buffers: int = 2):
    """x: [B, S, H]; wgu: [H, 2*I] (from prepare_mlp_weights); wd_t: [I, H]."""
    B, S, H = x.shape
    I = wd_t.shape[0]
    assert wgu.shape == (H, 2 * I) and wd_t.shape == (I, H)
    assert I % ti == 0

    vmem_cap = _vmem_capacity_bytes()
    if block_m is None:
        # Weights re-stream once per row tile => arithmetic intensity ~ tm.
        # Push tm to the per-generation VMEM ceiling: 512 on 128-MiB parts
        # (v5e/v6e), 256 on 64-MiB parts (v7x).
        block_m = 512 if vmem_cap >= (100 << 20) else 256

    M = B * S
    dtype = x.dtype
    x_bytes = dtype.itemsize
    w_bytes = wgu.dtype.itemsize
    row_align = 8 if x_bytes == 4 else 16  # sublane packing for 32- vs 16-bit

    tm = max(row_align, min(block_m, _round_up(M, row_align)))
    tm = _round_up(tm, row_align)
    Mp = _round_up(M, tm)

    x2d = x.reshape(M, H)
    if Mp != M:
        x2d = jnp.pad(x2d, ((0, Mp - M), (0, 0)))

    grid = (Mp // tm, I // ti)
    n_row_tiles = grid[0]

    approx_silu = (dtype == jnp.bfloat16)
    kernel = functools.partial(_mlp_kernel, ti=ti, approx_silu=approx_silu)

    # Advisory cost hint: 3 matmuls, 2 EUP ops per intermediate element, and
    # the weight tiles are re-streamed once per row tile.
    cost = pl.CostEstimate(
        flops=6 * M * H * I,
        transcendentals=2 * M * I,
        bytes_accessed=(x2d.size * x_bytes + M * H * x_bytes
                        + n_row_tiles * (wgu.size + wd_t.size) * w_bytes),
    )

    # VMEM budget: double-buffered x / weight / output blocks, the f32
    # accumulator, the f32 value temporaries (gu/gate/up/sig/inter), the cast
    # copy of inter, plus headroom for Mosaic internal scratch.
    vmem_est = (
        2 * tm * H * x_bytes          # x blocks
        + 2 * H * (2 * ti) * w_bytes  # fused gate|up weight blocks
        + 2 * ti * H * w_bytes        # down-proj weight blocks
        + 2 * tm * H * x_bytes        # output blocks
        + tm * H * 4                  # f32 accumulator scratch
        + 5 * tm * ti * 4             # gu/gate/up/sig/inter f32 temporaries
        + tm * ti * w_bytes           # inter cast for the down matmul
    )
    headroom = 8 << 20
    # Always set the limit (v5e's default is only ~16 MiB) but never request
    # more than physical VMEM minus headroom (v7x has only 64 MiB).
    vmem_limit = min(max(vmem_est + headroom, 32 << 20),
                     max(vmem_cap - headroom, 32 << 20))

    compiler_params = pltpu.CompilerParams(
        dimension_semantics=("parallel", "arbitrary"),
        vmem_limit_bytes=int(vmem_limit),
    )

    # Optionally deepen weight buffering (useful on v6e if the weight DMA is
    # still exposed after enlarging tm; skip on v7x where VMEM is tight).
    if weight_buffers > 2:
        wgu_spec = pl.BlockSpec((H, 2 * ti), lambda i, j: (0, j),
                                pipeline_mode=pl.Buffered(weight_buffers))
        wd_spec = pl.BlockSpec((ti, H), lambda i, j: (j, 0),
                               pipeline_mode=pl.Buffered(weight_buffers))
    else:
        wgu_spec = pl.BlockSpec((H, 2 * ti), lambda i, j: (0, j))
        wd_spec = pl.BlockSpec((ti, H), lambda i, j: (j, 0))

    out2d = pl.pallas_call(
        kernel,
        out_shape=jax.ShapeDtypeStruct((Mp, H), dtype),
        grid_spec=pltpu.PrefetchScalarGridSpec(
            num_scalar_prefetch=0,
            grid=grid,
            in_specs=[
                pl.BlockSpec((tm, H), lambda i, j: (i, 0)),  # x rows
                wgu_spec,                                    # [gate_j | up_j]
                wd_spec,                                     # down chunk j
            ],
            out_specs=pl.BlockSpec((tm, H), lambda i, j: (i, 0)),
            scratch_shapes=[pltpu.VMEM((tm, H), jnp.float32)],  # f32 accumulator
        ),
        compiler_params=compiler_params,
        cost_estimate=cost,
    )(x2d, wgu, wd_t)

    return out2d[:M].reshape(B, S, H)


def mlp_reference(x, wg, wu, wd):
    gate = jnp.einsum("bsh,ih->bsi", x, wg)
    up = jnp.einsum("bsh,ih->bsi", x, wu)
    inter = jax.nn.silu(gate) * up
    return jnp.einsum("bsi,hi->bsh", inter, wd)


def _make_case(key, B, S, H):
    I = 4 * H
    kx, kg, ku, kd = jax.random.split(key, 4)
    x = jax.random.normal(kx, (B, S, H), dtype=jnp.float32)
    wg = jax.random.normal(kg, (I, H), dtype=jnp.float32) * 0.05
    wu = jax.random.normal(ku, (I, H), dtype=jnp.float32) * 0.05
    wd = jax.random.normal(kd, (H, I), dtype=jnp.float32) * 0.05
    return x, wg, wu, wd


if __name__ == "__main__":
    key = jax.random.PRNGKey(0)
    k1, k2 = jax.random.split(key)

    # 1) Module-sized config: n_embed = 32 -> H=32, I=128.  Default tiling
    #    (single block at these toy shapes), f32, tight tolerance.
    B, S, H = 2, 8, 32
    x, wg, wu, wd = _make_case(k1, B, S, H)
    ref = mlp_reference(x, wg, wu, wd)

    wgu, wd_t, ti = prepare_mlp_weights(wg, wu, wd)
    out = jax.block_until_ready(mlp_forward(x, wgu, wd_t, ti))
    assert out.shape == (B, S, H)
    assert jnp.allclose(out, ref, atol=1e-4, rtol=1e-4), "mismatch (default tiles)"

    # 2) bf16 weights (production path): kernel runs the MXU in bf16 with f32
    #    accumulation; compare against the f32 reference with loose tolerance.
    wgu_b, wd_t_b, ti_b = prepare_mlp_weights(wg, wu, wd,
                                              weight_dtype=jnp.bfloat16)
    out_b = jax.block_until_ready(mlp_forward(x, wgu_b, wd_t_b, ti_b))
    assert jnp.allclose(out_b, ref, atol=2e-2, rtol=5e-2), "mismatch (bf16 weights)"

    # 3) Larger toy (H=128 -> I=512) with small tiles to exercise the real
    #    (row tiles x I-chunks) accumulation grid: grid = (2, 4).
    B2, S2, H2 = 2, 8, 128
    x2, wg2, wu2, wd2 = _make_case(k2, B2, S2, H2)
    ref2 = mlp_reference(x2, wg2, wu2, wd2)
    wgu2, wd_t2, ti2 = prepare_mlp_weights(wg2, wu2, wd2, block_i=128)
    out2 = jax.block_until_ready(mlp_forward(x2, wgu2, wd_t2, ti2, block_m=8))
    assert jnp.allclose(out2, ref2, atol=1e-4, rtol=1e-4), "mismatch (tiled grid)"

    print("KERNEL_OK")
</pallas_src>

<mosaic_0001>
module attributes {stable_mosaic.version = 11 : i64} {
  func.func @_mlp_kernel(%arg0: i32, %arg1: i32, %arg2: memref<16x32xf32, #tpu.memory_space<vmem>>, %arg3: memref<32x256xf32, #tpu.memory_space<vmem>>, %arg4: memref<128x32xf32, #tpu.memory_space<vmem>>, %arg5: memref<16x32xf32, #tpu.memory_space<vmem>>, %arg6: memref<16x32xf32, #tpu.memory_space<vmem>>) attributes {dimension_semantics = [#tpu.dimension_semantics<parallel>, #tpu.dimension_semantics<arbitrary>], iteration_bounds = array<i64: 1, 1>, scalar_prefetch = 0 : i64, scratch_operands = 1 : i64, tpu.core_type = #tpu.core_type<tc>, window_params = [{transform_indices = @transform_0, window_bounds = array<i64: 16, 32>}, {transform_indices = @transform_1, window_bounds = array<i64: 32, 256>}, {transform_indices = @transform_2, window_bounds = array<i64: 128, 32>}, {transform_indices = @transform_3, window_bounds = array<i64: 16, 32>}]} {
    %c0_i32 = arith.constant 0 : i32
    %0 = arith.cmpi eq, %arg1, %c0_i32 : i32
    %1 = arith.extui %0 : i1 to i32
    %c0_i32_0 = arith.constant 0 : i32
    %2 = arith.cmpi ne, %1, %c0_i32_0 : i32
    scf.if %2 {
      %cst_15 = arith.constant 0.000000e+00 : f32
      %24 = vector.broadcast %cst_15 : f32 to vector<16x32xf32>
      %c0_16 = arith.constant 0 : index
      %c0_17 = arith.constant 0 : index
      %25 = vector.load %arg6[%c0_16, %c0_17] : memref<16x32xf32, #tpu.memory_space<vmem>>, vector<16x32xf32>
      tpu.vector_store %arg6[%c0_16, %c0_17], %24 {strides = array<i32>} : memref<16x32xf32, #tpu.memory_space<vmem>>, vector<16x32xf32>,
    } else {
    }
    %c0 = arith.constant 0 : index
    %c0_1 = arith.constant 0 : index
    %3 = vector.load %arg2[%c0, %c0_1] : memref<16x32xf32, #tpu.memory_space<vmem>>, vector<16x32xf32>
    %c0_2 = arith.constant 0 : index
    %c0_3 = arith.constant 0 : index
    %4 = vector.load %arg3[%c0_2, %c0_3] : memref<32x256xf32, #tpu.memory_space<vmem>>, vector<32x256xf32>
    %cst = arith.constant dense<0.000000e+00> : vector<16x256xf32>
    %5 = tpu.matmul %3, %4, %cst {dimension_numbers = #tpu.dot_dimension_numbers<[1], [0], [0], [1], [0, 0, 1, 1], [], []>} : vector<16x32xf32>, vector<32x256xf32>, vector<16x256xf32> -> vector<16x256xf32>
    %6 = vector.extract_strided_slice %5 {offsets = [0, 0], sizes = [16, 128], strides = [1, 1]} : vector<16x256xf32> to vector<16x128xf32>
    %7 = vector.extract_strided_slice %5 {offsets = [0, 128], sizes = [16, 128], strides = [1, 1]} : vector<16x256xf32> to vector<16x128xf32>
    %cst_4 = arith.constant 0.000000e+00 : f32
    %8 = vector.broadcast %cst_4 : f32 to vector<16x128xf32>
    %9 = arith.subf %8, %6 : vector<16x128xf32>
    %10 = math.exp %9 : vector<16x128xf32>
    %cst_5 = arith.constant 1.000000e+00 : f32
    %11 = vector.broadcast %cst_5 : f32 to vector<16x128xf32>
    %12 = arith.addf %11, %10 : vector<16x128xf32>
    %13 = tpu.reciprocal %12 : vector<16x128xf32> -> vector<16x128xf32>
    %14 = arith.mulf %6, %13 : vector<16x128xf32>
    %15 = arith.mulf %14, %7 : vector<16x128xf32>
    %c0_6 = arith.constant 0 : index
    %c0_7 = arith.constant 0 : index
    %16 = vector.load %arg6[%c0_6, %c0_7] : memref<16x32xf32, #tpu.memory_space<vmem>>, vector<16x32xf32>
    %c0_8 = arith.constant 0 : index
    %c0_9 = arith.constant 0 : index
    %17 = vector.load %arg4[%c0_8, %c0_9] : memref<128x32xf32, #tpu.memory_space<vmem>>, vector<128x32xf32>
    %cst_10 = arith.constant dense<0.000000e+00> : vector<16x32xf32>
    %18 = tpu.matmul %15, %17, %cst_10 {dimension_numbers = #tpu.dot_dimension_numbers<[1], [0], [0], [1], [0, 0, 1, 1], [], []>} : vector<16x128xf32>, vector<128x32xf32>, vector<16x32xf32> -> vector<16x32xf32>
    %19 = arith.addf %16, %18 : vector<16x32xf32>
    %c0_11 = arith.constant 0 : index
    %c0_12 = arith.constant 0 : index
    %20 = vector.load %arg6[%c0_11, %c0_12] : memref<16x32xf32, #tpu.memory_space<vmem>>, vector<16x32xf32>
    tpu.vector_store %arg6[%c0_11, %c0_12], %19 {strides = array<i32>} : memref<16x32xf32, #tpu.memory_space<vmem>>, vector<16x32xf32>,
    %c0_i32_13 = arith.constant 0 : i32
    %21 = arith.cmpi eq, %arg1, %c0_i32_13 : i32
    %22 = arith.extui %21 : i1 to i32
    %c0_i32_14 = arith.constant 0 : i32
    %23 = arith.cmpi ne, %22, %c0_i32_14 : i32
    scf.if %23 {
      %c0_15 = arith.constant 0 : index
      %c0_16 = arith.constant 0 : index
      %24 = vector.load %arg6[%c0_15, %c0_16] : memref<16x32xf32, #tpu.memory_space<vmem>>, vector<16x32xf32>
      %c0_17 = arith.constant 0 : index
      %c0_18 = arith.constant 0 : index
      %25 = vector.load %arg5[%c0_17, %c0_18] : memref<16x32xf32, #tpu.memory_space<vmem>>, vector<16x32xf32>
      tpu.vector_store %arg5[%c0_17, %c0_18], %24 {strides = array<i32>} : memref<16x32xf32, #tpu.memory_space<vmem>>, vector<16x32xf32>,
    } else {
    }
    return
  }
  func.func @transform_0(%arg0: i32, %arg1: i32) -> (i32, i32) {
    %c0_i32 = arith.constant 0 : i32
    %c0_i32_0 = arith.constant 0 : i32
    return %arg0, %c0_i32 : i32, i32
  }
  func.func @transform_1(%arg0: i32, %arg1: i32) -> (i32, i32) {
    %c0_i32 = arith.constant 0 : i32
    %c0_i32_0 = arith.constant 0 : i32
    return %c0_i32, %arg1 : i32, i32
  }
  func.func @transform_2(%arg0: i32, %arg1: i32) -> (i32, i32) {
    %c0_i32 = arith.constant 0 : i32
    %c0_i32_0 = arith.constant 0 : i32
    return %arg1, %c0_i32 : i32, i32
  }
  func.func @transform_3(%arg0: i32, %arg1: i32) -> (i32, i32) {
    %c0_i32 = arith.constant 0 : i32
    %c0_i32_0 = arith.constant 0 : i32
    return %arg0, %c0_i32 : i32, i32
  }
}

</mosaic_0001>

<llo_original>
// kernel: tpu_custom_call.1
$region0: #{tpu_custom_call.1}
  #allocation0 [shape = 'u32[]', space=smem, size = 0x4, offset = 0x4, fixed_abs, tag = 'smem constant byte address 0x4 - core index']
  #allocation1 [shape = 'u32[144,128]{1,0:T(1,128)}', space=vmem, size = 0x12000, scoped, tag = 'internal scratch']
  #allocation2 [shape = 'f32[16,32]{1,0:T(8,128)}', space=vmem, size = 0x2000, scoped, tag = 'scratch operand']
  %s0 = inlined_call_operand.vmem [shape: f32[16,32], index: 0, kind: input, shape index: {}]
  %s1 = inlined_call_operand.vmem [shape: f32[32,256], index: 1, kind: input, shape index: {}]
  %s2 = inlined_call_operand.vmem [shape: f32[128,32], index: 2, kind: input, shape index: {}]
  %s3 = inlined_call_operand.hbm [shape: f32[16,32], index: 3, kind: output, shape index: {}]
  %s4 = sld [smem:[#allocation0]]
  $region30: #{tpu_custom_call.1} parent=0
    _
  %s6 = ssub.s32 1, %s4
  %s7 = scalar_select 0, %s6, %s4
  $region1: #{tpu_custom_call.1} parent=0
    #allocation3 [shape = 'u8[8192]{0}', space=vmem, size = 0x2000, scoped, tag = 'output window, operand 0, single buffered']
    #allocation4 [shape = 's32[1]{0}', space=sflag, size = 0x4, scoped, tag = 'scoped memory for tpu_custom_call.1']
    %8 = vsyncpa [#allocation4], 0
    // Predicated region
    $region2: #{tpu_custom_call.1} parent=1 // pred_check
      _
    $region3: #{tpu_custom_call.1} parent=1 // pred_check_branch
      %10 = sbr.rel (0) target = $region5
    $region4: #{tpu_custom_call.1} parent=1 // pred_region
      _
    $region5: #{tpu_custom_call.1} parent=1 // pred_fallthru
      _
    // Predicated region
    $region6: #{tpu_custom_call.1} parent=1 // pred_check
      _
    $region7: #{tpu_custom_call.1} parent=1 // pred_check_branch
      %12 = sbr.rel (0) target = $region9
    $region8: #{tpu_custom_call.1} parent=1 // pred_region
      _
    $region9: #{tpu_custom_call.1} parent=1 // pred_fallthru
      _
    // Predicated region
    $region10: #{tpu_custom_call.1} parent=1 // pred_check
      _
    $region11: #{tpu_custom_call.1} parent=1 // pred_check_branch
      %14 = sbr.rel (0) target = $region13
    $region12: #{tpu_custom_call.1} parent=1 // pred_region
      _
    $region13: #{tpu_custom_call.1} parent=1 // pred_fallthru
      _
    %p15 = scmp.eq.s32.totalorder 0, 0
    // Predicated region
    $region14: #{tpu_custom_call.1} parent=1 // pred_check
      %p16 = pneg %p15
    $region15: #{tpu_custom_call.1} parent=1 // pred_check_branch
      %18 = sbr.rel (%p16) target = $region17
    $region16: #{tpu_custom_call.1} parent=1 // pred_region
      %vm19 = vcmask 261120
      %20 = vst.msk [vmem:[#allocation2] sm:$0xff] %vm19, 0.0
      %21 = vst.msk [vmem:[#allocation2 + $0x8] sm:$0xff] %vm19, 0.0
    $region17: #{tpu_custom_call.1} parent=1 // pred_fallthru
      _
    %v22 = vld [vmem:[%s0] sm:$0xff]
    %v23 = vld [vmem:[%s0 + $0x8] sm:$0xff]
    %v24 = vld [vmem:[%s1] sm:$0xff]
    %v25 = vld [vmem:[%s1 + $0x8] sm:$0xff]
    %v26 = vld [vmem:[%s1 + $0x10] sm:$0xff]
    %v27 = vld [vmem:[%s1 + $0x18] sm:$0xff]
    %v28 = vld [vmem:[%s1 + $0x20] sm:$0xff]
    %v29 = vld [vmem:[%s1 + $0x28] sm:$0xff]
    %v30 = vld [vmem:[%s1 + $0x30] sm:$0xff]
    %v31 = vld [vmem:[%s1 + $0x38] sm:$0xff]
    %vm32 = vcmask 261120
    %v34 = vsel %vm32, %v22, 0
    %v37 = vsel %vm32, %v23, 0
    %39 = vmatprep.subr.mxu0 %v25
    %40 = vmatpush1.msra.mxu0 %v24
    %41 = vmatprep.subr.mxu0 %v27
    %42 = vmatpush1.msra.mxu0 %v26
    %43 = vmatprep.subr.mxu0 %v29
    %44 = vmatpush1.msra.mxu0 %v28
    %45 = vmatprep.subr.mxu0 %v31
    %46 = vmatpush1.msra.mxu0 %v30
    %47 = vmatprep.subr.mxu0 0.0
    %48 = vmatpush1.msra.mxu0 0.0
    %49 = vmatprep.subr.mxu0 0.0
    %50 = vmatpush1.msra.mxu0 0.0
    %51 = vmatprep.subr.mxu0 0.0
    %52 = vmatpush1.msra.mxu0 0.0
    %53 = vmatprep.subr.mxu0 0.0
    %54 = vmatpush1.msra.mxu0 0.0
    %55 = vmatprep.subr.mxu0 0.0
    %56 = vmatpush1.msra.mxu0 0.0
    %57 = vmatprep.subr.mxu0 0.0
    %58 = vmatpush1.msra.mxu0 0.0
    %59 = vmatprep.subr.mxu0 0.0
    %60 = vmatpush1.msra.mxu0 0.0
    %61 = vmatprep.subr.mxu0 0.0
    %62 = vmatpush1.msra.mxu0 0.0
    %63 = vmatprep.subr.mxu0 0.0
    %64 = vmatpush1.msra.mxu0 0.0
    %65 = vmatprep.subr.mxu0 0.0
    %66 = vmatpush1.msra.mxu0 0.0
    %67 = vmatprep.subr.mxu0 0.0
    %68 = vmatpush1.msra.mxu0 0.0
    %69 = vmatprep.subr.mxu0 0.0
    %70 = vmatpush1.msra.mxu0 0.0
    %71 = vmatprep.subr.mxu0 0.0
    %72 = vmatpush1.msra.mxu0 0.0
    %73 = vmatprep.subr.mxu0 0.0
    %74 = vmatpush1.msra.mxu0 0.0
    %75 = vmatprep.subr.mxu0 0.0
    %76 = vmatpush1.msra.mxu0 0.0
    %77 = vmatprep.subr.mxu0 0.0
    %78 = vmatpush1.msra.mxu0 0.0
    %79 = vmatprep.subr.mxu0 0.0
    %80 = vmatpush1.msra.mxu0 0.0
    %81 = vmatprep.subr.mxu0 0.0
    %82 = vmatpush1.msra.mxu0 0.0
    %83 = vmatprep.subr.mxu0 0.0
    %84 = vmatpush1.msra.mxu0 0.0
    %85 = vmatprep.subr.mxu0 0.0
    %86 = vmatpush1.msra.mxu0 0.0
    %87 = vmatprep.subr.mxu0 0.0
    %88 = vmatpush1.msra.mxu0 0.0
    %89 = vmatprep.subr.mxu0 0.0
    %90 = vmatpush1.msra.mxu0 0.0
    %91 = vmatprep.subr.mxu0 0.0
    %92 = vmatpush1.msra.mxu0 0.0
    %93 = vmatprep.subr.mxu0 0.0
    %94 = vmatpush1.msra.mxu0 0.0
    %95 = vmatprep.subr.mxu0 0.0
    %96 = vmatpush1.msra.mxu0 0.0
    %97 = vmatprep.subr.mxu0 0.0
    %98 = vmatpush1.msra.mxu0 0.0
    %99 = vmatprep.subr.mxu0 0.0
    %100 = vmatpush1.msra.mxu0 0.0
    %101 = vmatprep.subr.mxu0 0.0
    %102 = vmatpush1.msra.mxu0 0.0
    %103 = vmatprep.mubr.f32.mxu0 0.0
    %104 = vmatmul.mubr.f32.gmra.mrb[0].mxu0 %v34
    %v105 = vpop.f32.mrb[0].mxu0
    %v106 = vadd.f32 0.0, %v105
    %v107 = vpop.f32.mrb[0].mxu0
    %v108 = vadd.f32 0.0, %v107
    %109 = vmatprep.mubr.f32.mxu0 0.0
    %110 = vmatmul.mubr.f32.gmra.mrb[0].mxu0 %v37
    %v111 = vpop.f32.mrb[0].mxu0
    %v112 = vadd.f32 0.0, %v111
    %v113 = vpop.f32.mrb[0].mxu0
    %v114 = vadd.f32 0.0, %v113
    %115 = vdwg.mxu0
    %v116 = vsub.f32 0.0, %v106
    %v117 = vsub.f32 0.0, %v112
    %v118 = vmul.f32 %v116, 1.442695
    %v119 = vpow.pop %v118
    %v120 = vmul.f32 %v117, 1.442695
    %v121 = vpow.pop %v120
    %v122 = vadd.f32 %v119, 1.0
    %v123 = vadd.f32 %v121, 1.0
    %v124 = vrcp.pop %v122
    %v125 = vrcp.pop %v123
    %v126 = vmul.f32 %v106, %v124
    %v127 = vmul.f32 %v112, %v125
    %v128 = vmul.f32 %v126, %v108
    %v129 = vmul.f32 %v127, %v114
    %v130 = vld [vmem:[#allocation2] sm:$0xff]
    %v131 = vld [vmem:[#allocation2 + $0x8] sm:$0xff]
    %v132 = vld [vmem:[%s2] sm:$0xff]
    %v133 = vld [vmem:[%s2 + $0x8] sm:$0xff]
    %v134 = vld [vmem:[%s2 + $0x10] sm:$0xff]
    %v135 = vld [vmem:[%s2 + $0x18] sm:$0xff]
    %v136 = vld [vmem:[%s2 + $0x20] sm:$0xff]
    %v137 = vld [vmem:[%s2 + $0x28] sm:$0xff]
    %v138 = vld [vmem:[%s2 + $0x30] sm:$0xff]
    %v139 = vld [vmem:[%s2 + $0x38] sm:$0xff]
    %v140 = vld [vmem:[%s2 + $0x40] sm:$0xff]
    %v141 = vld [vmem:[%s2 + $0x48] sm:$0xff]
    %v142 = vld [vmem:[%s2 + $0x50] sm:$0xff]
    %v143 = vld [vmem:[%s2 + $0x58] sm:$0xff]
    %v144 = vld [vmem:[%s2 + $0x60] sm:$0xff]
    %v145 = vld [vmem:[%s2 + $0x68] sm:$0xff]
    %v146 = vld [vmem:[%s2 + $0x70] sm:$0xff]
    %v147 = vld [vmem:[%s2 + $0x78] sm:$0xff]
    %148 = vmatprep.subr.mxu0 0.0
    %149 = vmatpush1.msra.mxu0 %v132
    %150 = vmatprep.subr.mxu0 0.0
    %151 = vmatpush1.msra.mxu0 %v133
    %152 = vmatprep.subr.mxu0 0.0
    %153 = vmatpush1.msra.mxu0 %v134
    %154 = vmatprep.subr.mxu0 0.0
    %155 = vmatpush1.msra.mxu0 %v135
    %156 = vmatprep.subr.mxu0 0.0
    %157 = vmatpush1.msra.mxu0 %v136
    %158 = vmatprep.subr.mxu0 0.0
    %159 = vmatpush1.msra.mxu0 %v137
    %160 = vmatprep.subr.mxu0 0.0
    %161 = vmatpush1.msra.mxu0 %v138
    %162 = vmatprep.subr.mxu0 0.0
    %163 = vmatpush1.msra.mxu0 %v139
    %164 = vmatprep.subr.mxu0 0.0
    %165 = vmatpush1.msra.mxu0 %v140
    %166 = vmatprep.subr.mxu0 0.0
    %167 = vmatpush1.msra.mxu0 %v141
    %168 = vmatprep.subr.mxu0 0.0
    %169 = vmatpush1.msra.mxu0 %v142
    %170 = vmatprep.subr.mxu0 0.0
    %171 = vmatpush1.msra.mxu0 %v143
    %172 = vmatprep.subr.mxu0 0.0
    %173 = vmatpush1.msra.mxu0 %v144
    %174 = vmatprep.subr.mxu0 0.0
    %175 = vmatpush1.msra.mxu0 %v145
    %176 = vmatprep.subr.mxu0 0.0
    %177 = vmatpush1.msra.mxu0 %v146
    %178 = vmatprep.subr.mxu0 0.0
    %179 = vmatpush1.msra.mxu0 %v147
    %180 = vmatprep.subr.mxu0 0.0
    %181 = vmatpush1.msra.mxu0 0.0
    %182 = vmatprep.subr.mxu0 0.0
    %183 = vmatpush1.msra.mxu0 0.0
    %184 = vmatprep.subr.mxu0 0.0
    %185 = vmatpush1.msra.mxu0 0.0
    %186 = vmatprep.subr.mxu0 0.0
    %187 = vmatpush1.msra.mxu0 0.0
    %188 = vmatprep.subr.mxu0 0.0
    %189 = vmatpush1.msra.mxu0 0.0
    %190 = vmatprep.subr.mxu0 0.0
    %191 = vmatpush1.msra.mxu0 0.0
    %192 = vmatprep.subr.mxu0 0.0
    %193 = vmatpush1.msra.mxu0 0.0
    %194 = vmatprep.subr.mxu0 0.0
    %195 = vmatpush1.msra.mxu0 0.0
    %196 = vmatprep.subr.mxu0 0.0
    %197 = vmatpush1.msra.mxu0 0.0
    %198 = vmatprep.subr.mxu0 0.0
    %199 = vmatpush1.msra.mxu0 0.0
    %200 = vmatprep.subr.mxu0 0.0
    %201 = vmatpush1.msra.mxu0 0.0
    %202 = vmatprep.subr.mxu0 0.0
    %203 = vmatpush1.msra.mxu0 0.0
    %204 = vmatprep.subr.mxu0 0.0
    %205 = vmatpush1.msra.mxu0 0.0
    %206 = vmatprep.subr.mxu0 0.0
    %207 = vmatpush1.msra.mxu0 0.0
    %208 = vmatprep.subr.mxu0 0.0
    %209 = vmatpush1.msra.mxu0 0.0
    %210 = vmatprep.subr.mxu0 0.0
    %211 = vmatpush1.msra.mxu0 0.0
    %212 = vmatprep.mubr.f32.mxu0 0.0
    %213 = vmatmul.mubr.f32.gmra.mrb[0].mxu0 %v128
    %v214 = vpop.f32.mrb[0].mxu0
    %v215 = vadd.f32 0.0, %v214
    %v216 = vpop.f32.mrb[0].mxu0
    %217 = vmatprep.mubr.f32.mxu0 0.0
    %218 = vmatmul.mubr.f32.gmra.mrb[0].mxu0 %v129
    %v219 = vpop.f32.mrb[0].mxu0
    %v220 = vadd.f32 0.0, %v219
    %v221 = vpop.f32.mrb[0].mxu0
    %222 = vdwg.mxu0
    %v223 = vadd.f32 %v130, %v215
    %v224 = vadd.f32 %v131, %v220
    %225 = vst.msk [vmem:[#allocation2] sm:$0xff] %vm32, %v223
    %226 = vst.msk [vmem:[#allocation2 + $0x8] sm:$0xff] %vm32, %v224
    // Predicated region
    $region18: #{tpu_custom_call.1} parent=1 // pred_check
      %p227 = pneg %p15
    $region19: #{tpu_custom_call.1} parent=1 // pred_check_branch
      %229 = sbr.rel (%p227) target = $region21
    $region20: #{tpu_custom_call.1} parent=1 // pred_region
      %v230 = vld [vmem:[#allocation2] sm:$0xff]
      %v231 = vld [vmem:[#allocation2 + $0x8] sm:$0xff]
      %232 = vst.msk [vmem:[#allocation3] sm:$0xff] %vm32, %v230
      %233 = vst.msk [vmem:[#allocation3 + $0x8] sm:$0xff] %vm32, %v231
    $region21: #{tpu_custom_call.1} parent=1 // pred_fallthru
      _
    // Predicated region
    $region22: #{tpu_custom_call.1} parent=1 // pred_check
      _
    $region23: #{tpu_custom_call.1} parent=1 // pred_check_branch
      %235 = sbr.rel (0) target = $region25
    $region24: #{tpu_custom_call.1} parent=1 // pred_region
      %s237 = ssub.s32 256, 256
      %238 = vsyncadd [#allocation4], %s237
      %s239 = sshll.u32 [#allocation3], 4
      %s240 = int_to_ptr.vmem [resolvable:$true] %s239
      %245 = dma.vmem_to_hbm [thread:$0]  %s240, 256, %s3, [#allocation4], 128, 128, 8
    $region25: #{tpu_custom_call.1} parent=1 // pred_fallthru
      _
    // Predicated region
    $region26: #{tpu_custom_call.1} parent=1 // pred_check
      _
    $region27: #{tpu_custom_call.1} parent=1 // pred_check_branch
      %247 = sbr.rel (0) target = $region29
    $region28: #{tpu_custom_call.1} parent=1 // pred_region
      %248 = dma.done [#allocation4], 256
    $region29: #{tpu_custom_call.1} parent=1 // pred_fallthru
      _
    %249 = vsyncpa [#allocation4], 1

</llo_original>
